<compile_context>
chip_gen: v7x
topology: tpu7x:2x2x1
jax: 0.10.0
libtpu: 0.0.40
codegen_flags: <defaults>
</compile_context>

<pallas_src>
import numpy as np
import jax
import jax.numpy as jnp
from jax.experimental import pallas as pl
from jax.experimental.pallas import tpu as pltpu


def _round_up(x, m):
    return ((x + m - 1) // m) * m


# ----------------------------------------------------------------------------
# Pallas kernel: one lane-dense MXU dot per M-tile (K folded into the depth).
#   x_ref : [tm, K*Cin]  bf16  (gathered activations, folded over kernel taps)
#   w_ref : [K*Cin, Cp]  bf16  (whole weight, VMEM-resident; Cp = pad(Cout,128))
#   b_ref : [1, Cp]      f32   (bias, VMEM-resident)
#   o_ref : [tm, Cp]     bf16  (lane-dense -> unmasked vst)
# ----------------------------------------------------------------------------
def _sparse_conv_kernel(x_ref, w_ref, b_ref, o_ref):
    acc = jnp.dot(x_ref[...], w_ref[...], preferred_element_type=jnp.float32)
    o_ref[...] = (acc + b_ref[...]).astype(o_ref.dtype)


def sparse_inverse_conv3d_pallas(x_flat, w_flat, bias2d, *, tm):
    """x_flat [M, K*Cin] bf16, w_flat [K*Cin, Cp] bf16, bias2d [1, Cp] f32 -> [M, Cp] bf16."""
    M, KC = x_flat.shape
    KC2, Cp = w_flat.shape
    assert KC == KC2 and M % tm == 0 and Cp % 128 == 0

    # Explicit VMEM budget: 2 buffers for the x tile, 2 for the out tile, plus
    # the resident weight/bias.  Capped well below v7x's 64 MiB physical VMEM.
    vmem_bytes = (2 * tm * KC * 2) + (2 * tm * Cp * 2) + (KC * Cp * 2) + Cp * 4
    vmem_limit = int(min(48 * 2**20, max(2 * vmem_bytes, 16 * 2**20)))

    cost = pl.CostEstimate(
        flops=2 * M * KC * Cp,
        transcendentals=0,
        bytes_accessed=M * KC * 2 + KC * Cp * 2 + Cp * 4 + M * Cp * 2,
    )

    return pl.pallas_call(
        _sparse_conv_kernel,
        out_shape=jax.ShapeDtypeStruct((M, Cp), jnp.bfloat16),
        grid_spec=pltpu.PrefetchScalarGridSpec(
            num_scalar_prefetch=0,
            grid=(M // tm,),
            in_specs=[
                pl.BlockSpec((tm, KC), lambda m: (m, 0)),   # activations, tiled over M
                pl.BlockSpec((KC, Cp), lambda m: (0, 0)),   # weight: VMEM-resident
                pl.BlockSpec((1, Cp), lambda m: (0, 0)),    # bias:   VMEM-resident
            ],
            out_specs=pl.BlockSpec((tm, Cp), lambda m: (m, 0)),
        ),
        compiler_params=pltpu.CompilerParams(
            dimension_semantics=("parallel",),
            vmem_limit_bytes=vmem_limit,
        ),
        cost_estimate=cost,
    )(x_flat, w_flat, bias2d)


# ----------------------------------------------------------------------------
# Host-side kernel map (vectorized numpy coordinate hashing).  Returns
# nbmap [m_pad, K] of input-row indices; value n_in means "no neighbor"
# (points at the appended all-zero feature row).
# ----------------------------------------------------------------------------
_KMAP_CACHE = {}


def build_kernel_map(coords_np, kernel_size, m_pad, n_in, *, dilation=1,
                     flip=True, indice_key=None):
    coords = np.asarray(coords_np, dtype=np.int64)

    cache_key = None
    if indice_key is not None:
        cache_key = (indice_key, kernel_size, dilation, flip, m_pad, n_in,
                     hash(coords.tobytes()))
        cached = _KMAP_CACHE.get(cache_key)
        if cached is not None:
            return cached

    ks = kernel_size
    c = ks // 2
    K = ks ** 3
    reach = c * dilation

    b = coords[:, 0]
    xyz = coords[:, 1:4]
    mins = xyz.min(axis=0) - reach
    span = xyz.max(axis=0) + reach - mins + 1   # per-dim extent covering all queries

    def linear_key(bb, p):
        q = p - mins                             # always >= 0 and < span
        return ((bb * span[0] + q[:, 0]) * span[1] + q[:, 1]) * span[2] + q[:, 2]

    in_keys = linear_key(b, xyz)
    order = np.argsort(in_keys, kind="stable")
    sorted_keys = in_keys[order]

    offsets = np.array(
        [(dx - c, dy - c, dz - c)
         for dx in range(ks) for dy in range(ks) for dz in range(ks)],
        dtype=np.int64) * dilation
    if flip:
        offsets = -offsets   # transposed conv: spatially flipped taps

    nbmap = np.full((m_pad, K), n_in, dtype=np.int32)
    for k in range(K):
        q_keys = linear_key(b, xyz + offsets[k])
        pos = np.clip(np.searchsorted(sorted_keys, q_keys), 0, n_in - 1)
        hit = sorted_keys[pos] == q_keys
        nbmap[:n_in, k] = np.where(hit, order[pos], n_in).astype(np.int32)

    if cache_key is not None:
        _KMAP_CACHE[cache_key] = nbmap
    return nbmap


def _choose_tm(n, tm_max, sub=16):
    # Grow the tile (amortize ~0.35us/step) but keep >= ~4 grid steps so the
    # "parallel" M axis can shard across both TensorCores on v7x.
    tm = _round_up(max(n // 4, sub), sub)
    return max(sub, min(tm, tm_max))


def sparse_inverse_conv3d(feats, coords, weight, bias, kernel_size, *,
                          dilation=1, tm_max=4096, indice_key=None):
    """feats [N, Cin], coords [N, 4] -> (out_feats [N, Cout] bf16, coords)."""
    N, Cin = feats.shape
    K, _, Cout = weight.shape
    assert K == kernel_size ** 3
    LANE = 128

    cout_pad = _round_up(Cout, LANE)
    tm = _choose_tm(N, tm_max)
    m_pad = _round_up(N, tm)

    nbmap = build_kernel_map(np.asarray(coords), kernel_size, m_pad, N,
                             dilation=dilation, indice_key=indice_key)

    # Append a zero row so "missing neighbor" / pad-row gathers contribute 0.
    feats_padded = jnp.concatenate(
        [feats.astype(jnp.bfloat16), jnp.zeros((1, Cin), jnp.bfloat16)], axis=0)
    # TODO(synk): XLA gather materializes [m_pad, K*Cin] bf16 in HBM (written
    # once, read once by the kernel); see header TODO for the in-kernel option.
    x_flat = feats_padded[jnp.asarray(nbmap)].reshape(m_pad, K * Cin)

    # Fold the weight to [K*Cin, Cout] and pad Cout to a lane-dense 128 multiple.
    w_flat = weight.reshape(K * Cin, Cout).astype(jnp.bfloat16)
    w_flat = jnp.pad(w_flat, ((0, 0), (0, cout_pad - Cout)))
    bias2d = jnp.pad(bias.astype(jnp.float32), (0, cout_pad - Cout)).reshape(1, cout_pad)

    out_padded = sparse_inverse_conv3d_pallas(x_flat, w_flat, bias2d, tm=tm)
    # Consumers that can accept the lane-padded bf16 slab should take
    # out_padded directly; the narrow view is only for module-API parity.
    out = out_padded[:N, :Cout]
    # stride == 1  ->  layout (coords) preserved, _scale unchanged
    return out, coords


if __name__ == "__main__":
    B, Cin, Cout, S, ks = 2, 16, 32, 16, 3
    K = ks ** 3
    n_per_batch = 30
    N = B * n_per_batch

    key = jax.random.PRNGKey(0)
    k_coord, k_feat, k_w, k_b = jax.random.split(key, 4)

    # Unique sparse coordinates per batch element in an S^3 grid.
    coords_list = []
    for b in range(B):
        kb = jax.random.fold_in(k_coord, b)
        flat = jax.random.choice(kb, S * S * S, shape=(n_per_batch,), replace=False)
        xyz = jnp.stack(jnp.unravel_index(flat, (S, S, S)), axis=-1).astype(jnp.int32)
        bcol = jnp.full((n_per_batch, 1), b, dtype=jnp.int32)
        coords_list.append(jnp.concatenate([bcol, xyz], axis=-1))
    coords = jnp.concatenate(coords_list, axis=0)            # [N, 4] (b, x, y, z)

    feats = jax.random.normal(k_feat, (N, Cin), jnp.float32)
    # torchsparse Conv3d weight layout: [kernel_volume, in_channels, out_channels]
    weight = 0.05 * jax.random.normal(k_w, (K, Cin, Cout), jnp.float32)
    bias = 0.1 * jax.random.normal(k_b, (Cout,), jnp.float32)

    out_feats, out_coords = sparse_inverse_conv3d(
        feats, coords, weight, bias, ks, indice_key="demo")
    out_feats = jax.block_until_ready(out_feats)

    # Pure-JAX f32 reference using the same (flipped) kernel map.  Kernel runs
    # bf16 in / bf16 out with f32 accumulation -> bf16-level tolerance.
    nbmap_ref = build_kernel_map(np.asarray(coords), ks, N, N)
    feats_ref = jnp.concatenate([feats, jnp.zeros((1, Cin), feats.dtype)], axis=0)
    xg = feats_ref[jnp.asarray(nbmap_ref)]                    # [N, K, Cin] f32
    ref = jnp.einsum("mkc,kcd->md", xg, weight) + bias

    np.testing.assert_allclose(np.asarray(out_feats).astype(np.float32),
                               np.asarray(ref), rtol=3e-2, atol=3e-2)

    assert out_feats.shape == (N, Cout)
    assert out_coords.shape == coords.shape
    print("KERNEL_OK")
</pallas_src>

<mosaic_0001>
module attributes {stable_mosaic.version = 11 : i64} {
  func.func @_sparse_conv_kernel(%arg0: i32, %arg1: memref<16x432xbf16, #tpu.memory_space<vmem>>, %arg2: memref<432x128xbf16, #tpu.memory_space<vmem>>, %arg3: memref<1x128xf32, #tpu.memory_space<vmem>>, %arg4: memref<16x128xbf16, #tpu.memory_space<vmem>>) attributes {dimension_semantics = [#tpu.dimension_semantics<parallel>], iteration_bounds = array<i64: 4>, scalar_prefetch = 0 : i64, scratch_operands = 0 : i64, tpu.core_type = #tpu.core_type<tc>, window_params = [{transform_indices = @transform_0, window_bounds = array<i64: 16, 432>}, {pipeline_mode = #tpu.pipeline_mode<synchronous>, transform_indices = @transform_1, window_bounds = array<i64: 432, 128>}, {pipeline_mode = #tpu.pipeline_mode<synchronous>, transform_indices = @transform_2, window_bounds = array<i64: 1, 128>}, {transform_indices = @transform_3, window_bounds = array<i64: 16, 128>}]} {
    %c0 = arith.constant 0 : index
    %c0_0 = arith.constant 0 : index
    %0 = vector.load %arg1[%c0, %c0_0] : memref<16x432xbf16, #tpu.memory_space<vmem>>, vector<16x432xbf16>
    %c0_1 = arith.constant 0 : index
    %c0_2 = arith.constant 0 : index
    %1 = vector.load %arg2[%c0_1, %c0_2] : memref<432x128xbf16, #tpu.memory_space<vmem>>, vector<432x128xbf16>
    %cst = arith.constant dense<0.000000e+00> : vector<16x128xf32>
    %2 = tpu.matmul %0, %1, %cst {dimension_numbers = #tpu.dot_dimension_numbers<[1], [0], [0], [1], [0, 0, 1, 1], [], []>} : vector<16x432xbf16>, vector<432x128xbf16>, vector<16x128xf32> -> vector<16x128xf32>
    %c0_3 = arith.constant 0 : index
    %c0_4 = arith.constant 0 : index
    %3 = vector.load %arg3[%c0_3, %c0_4] : memref<1x128xf32, #tpu.memory_space<vmem>>, vector<1x128xf32>
    %4 = vector.broadcast %3 : vector<1x128xf32> to vector<16x128xf32>
    %5 = arith.addf %2, %4 : vector<16x128xf32>
    %6 = arith.truncf %5 : vector<16x128xf32> to vector<16x128xbf16>
    %c0_5 = arith.constant 0 : index
    %c0_6 = arith.constant 0 : index
    %7 = vector.load %arg4[%c0_5, %c0_6] : memref<16x128xbf16, #tpu.memory_space<vmem>>, vector<16x128xbf16>
    tpu.vector_store %arg4[%c0_5, %c0_6], %6 {strides = array<i32>} : memref<16x128xbf16, #tpu.memory_space<vmem>>, vector<16x128xbf16>,
    return
  }
  func.func @transform_0(%arg0: i32) -> (i32, i32) {
    %c0_i32 = arith.constant 0 : i32
    %c0_i32_0 = arith.constant 0 : i32
    return %arg0, %c0_i32 : i32, i32
  }
  func.func @transform_1(%arg0: i32) -> (i32, i32) {
    %c0_i32 = arith.constant 0 : i32
    %c0_i32_0 = arith.constant 0 : i32
    %c0_i32_1 = arith.constant 0 : i32
    return %c0_i32, %c0_i32_0 : i32, i32
  }
  func.func @transform_2(%arg0: i32) -> (i32, i32) {
    %c0_i32 = arith.constant 0 : i32
    %c0_i32_0 = arith.constant 0 : i32
    %c0_i32_1 = arith.constant 0 : i32
    return %c0_i32, %c0_i32_0 : i32, i32
  }
  func.func @transform_3(%arg0: i32) -> (i32, i32) {
    %c0_i32 = arith.constant 0 : i32
    %c0_i32_0 = arith.constant 0 : i32
    return %arg0, %c0_i32 : i32, i32
  }
}

</mosaic_0001>

<llo_original>
// kernel: tpu_custom_call.1
$region0: #{tpu_custom_call.1}
  #allocation0 [shape = 'u32[]', space=smem, size = 0x4, offset = 0x4, fixed_abs, tag = 'smem constant byte address 0x4 - core index']
  #allocation1 [shape = 'u32[144,128]{1,0:T(1,128)}', space=vmem, size = 0x12000, scoped, tag = 'internal scratch']
  %s0 = inlined_call_operand.hbm [shape: bf16[64,432], index: 0, kind: input, shape index: {}]
  %s1 = inlined_call_operand.hbm [shape: bf16[432,128], index: 1, kind: input, shape index: {}]
  %s2 = inlined_call_operand.vmem [shape: f32[1,128], index: 2, kind: input, shape index: {}]
  %s3 = inlined_call_operand.hbm [shape: bf16[64,128], index: 3, kind: output, shape index: {}]
  %s4 = sld [smem:[#allocation0]]
  $region53: #{tpu_custom_call.1} parent=0
    _
  %s6 = ssub.s32 1, %s4
  %s7 = scalar_select 0, %s6, %s4
  $region1: #{tpu_custom_call.1} parent=0
    #allocation2 [shape = 'u8[32768]{0}', space=vmem, size = 0x8000, scoped, tag = 'input window, operand 0']
    #allocation3 [shape = 's32[2]{0}', space=sflag, size = 0x8, scoped, tag = 'scoped memory for tpu_custom_call.1']
    #allocation4 [shape = 's32[2]{0}', space=sflag, size = 0x8, scoped, tag = 'scoped memory for tpu_custom_call.1']
    #allocation5 [shape = 'u8[110592]{0}', space=vmem, size = 0x1b000, scoped, tag = 'input window, operand 1, single buffered']
    #allocation6 [shape = 's32[1]{0}', space=sflag, size = 0x4, scoped, tag = 'scoped memory for tpu_custom_call.1']
    #allocation7 [shape = 'u8[8192]{0}', space=vmem, size = 0x2000, scoped, tag = 'output window, operand 0']
    %8 = vsyncpa [#allocation3], 0
    %s9 = scalar_lea.sflag [#allocation3], 1
    %10 = vsyncpa %s9, 0
    %11 = vsyncpa [#allocation6], 0
    %12 = vsyncpa [#allocation4], 0
    %s13 = scalar_lea.sflag [#allocation4], 1
    %14 = vsyncpa %s13, 0
    loop: start=0, step=1, limit=6
    $region2: #{tpu_custom_call.1} parent=1 // loop_pre_header
      _
    $region3: #{tpu_custom_call.1} parent=1 // loop_header
      %s16 = sphi 0, %s20
      %p17 = scmp.ge.s32.totalorder %s16, 6
      %s26 = sphi 0, %s28
      %s29 = sphi 0, %s26
      %s30 = sphi 0, %s29
      %s46 = sphi 0, %s30
      %s50 = sphi 0, %s50
      %s52 = sphi 0, %s50
      %s53 = sphi 0, %s52
      %s67 = sphi 0, %s53
      %s71 = sphi 0, %s71
      %s73 = sphi 0, %s71
      %s74 = sphi 0, %s73
      %s88 = sphi 0, %s74
      %s94 = sphi 0, %s96
      %s97 = sphi 0, %s94
      %s98 = sphi 0, %s97
      %s114 = sphi 0, %s98
    $region4: #{tpu_custom_call.1} parent=1 // loop_header_branch
      %19 = sbr.rel (%p17) target = $region8
    $region5: #{tpu_custom_call.1} parent=1 // loop_body
      %s21 = ssub.s32 %s16, 1
      %s22 = ssub.s32 %s16, 2
      %s23 = sadd.s32 %s16, 1
      %s24 = ssub.s32 %s16, %s23
      %p25 = scmp.eq.s32.totalorder %s24, 0
      %s27 = sadd.s32 %s26, 1
      %s28 = scalar_select %p25, %s26, %s27
      %p31 = pneg %p25
      %p32 = scmp.eq.s32.totalorder %s16, 3
      %p33 = por %p31, %p32
      %p34 = scmp.ne.s32.totalorder %s26, %s29
      %p35 = scmp.eq.s32.totalorder %s16, 0
      %p36 = por %p34, %p35
      %p37 = scmp.ne.s32.totalorder %s26, %s29
      %p38 = scmp.eq.s32.totalorder %s21, 3
      %p39 = por %p37, %p38
      %p40 = scmp.ne.s32.totalorder %s29, %s30
      %p41 = scmp.eq.s32.totalorder %s21, 0
      %p42 = por %p40, %p41
      %p43 = scmp.ne.s32.totalorder %s29, %s30
      %p44 = scmp.eq.s32.totalorder %s22, 3
      %p45 = por %p43, %p44
      %p47 = scmp.ne.s32.totalorder %s30, %s46
      %p48 = scmp.eq.s32.totalorder %s22, 0
      %p49 = por %p47, %p48
      %s51 = sadd.s32 %s50, 1
      %p54 = scmp.eq.s32.totalorder %s16, 3
      %p55 = scmp.ne.s32.totalorder %s50, %s52
      %p56 = scmp.eq.s32.totalorder %s16, 0
      %p57 = por %p55, %p56
      %p58 = scmp.ne.s32.totalorder %s50, %s52
      %p59 = scmp.eq.s32.totalorder %s21, 3
      %p60 = por %p58, %p59
      %p61 = scmp.ne.s32.totalorder %s52, %s53
      %p62 = scmp.eq.s32.totalorder %s21, 0
      %p63 = por %p61, %p62
      %p64 = scmp.ne.s32.totalorder %s52, %s53
      %p65 = scmp.eq.s32.totalorder %s22, 3
      %p66 = por %p64, %p65
      %p68 = scmp.ne.s32.totalorder %s53, %s67
      %p69 = scmp.eq.s32.totalorder %s22, 0
      %p70 = por %p68, %p69
      %s72 = sadd.s32 %s71, 1
      %p75 = scmp.eq.s32.totalorder %s16, 3
      %p76 = scmp.ne.s32.totalorder %s71, %s73
      %p77 = scmp.eq.s32.totalorder %s16, 0
      %p78 = por %p76, %p77
      %p79 = scmp.ne.s32.totalorder %s71, %s73
      %p80 = scmp.eq.s32.totalorder %s21, 3
      %p81 = por %p79, %p80
      %p82 = scmp.ne.s32.totalorder %s73, %s74
      %p83 = scmp.eq.s32.totalorder %s21, 0
      %p84 = por %p82, %p83
      %p85 = scmp.ne.s32.totalorder %s73, %s74
      %p86 = scmp.eq.s32.totalorder %s22, 3
      %p87 = por %p85, %p86
      %p89 = scmp.ne.s32.totalorder %s74, %s88
      %p90 = scmp.eq.s32.totalorder %s22, 0
      %p91 = por %p89, %p90
      %s92 = ssub.s32 %s16, %s23
      %p93 = scmp.eq.s32.totalorder %s92, 0
      %s95 = sadd.s32 %s94, 1
      %s96 = scalar_select %p93, %s94, %s95
      %p99 = pneg %p93
      %p100 = scmp.eq.s32.totalorder %s16, 3
      %p101 = por %p99, %p100
      %p102 = scmp.ne.s32.totalorder %s94, %s97
      %p103 = scmp.eq.s32.totalorder %s16, 0
      %p104 = por %p102, %p103
      %p105 = scmp.ne.s32.totalorder %s94, %s97
      %p106 = scmp.eq.s32.totalorder %s21, 3
      %p107 = por %p105, %p106
      %p108 = scmp.ne.s32.totalorder %s97, %s98
      %p109 = scmp.eq.s32.totalorder %s21, 0
      %p110 = por %p108, %p109
      %p111 = scmp.ne.s32.totalorder %s97, %s98
      %p112 = scmp.eq.s32.totalorder %s22, 3
      %p113 = por %p111, %p112
      %p115 = scmp.ne.s32.totalorder %s98, %s114
      %p116 = scmp.eq.s32.totalorder %s22, 0
      %p117 = por %p115, %p116
      %p118 = scmp.le.s32.totalorder 1, %s16
      %p119 = scmp.lt.s32.totalorder %s16, 5
      %p120 = pnand %p118, %p119
      %p121 = pneg %p120
      // Predicated region
      $region9: #{tpu_custom_call.1} parent=5 // pred_check
        _
      $region10: #{tpu_custom_call.1} parent=5 // pred_check_branch
        %123 = sbr.rel (%p120) target = $region12
      $region11: #{tpu_custom_call.1} parent=5 // pred_region
        %s124 = ssub.s32 %s16, 1
        // Predicated region
        $region13: #{tpu_custom_call.1} parent=11 // pred_check
          %p125 = pneg %p63
        $region14: #{tpu_custom_call.1} parent=11 // pred_check_branch
          %127 = sbr.rel (%p125) target = $region16
        $region15: #{tpu_custom_call.1} parent=11 // pred_region
          %s129 = ssub.s32 3456, 3456
          %130 = vsyncadd [#allocation6], %s129
          %s131 = sshll.u32 [#allocation5], 4
          %s132 = int_to_ptr.vmem [resolvable:$true] %s131
          %137 = dma.hbm_to_vmem [thread:$0]  %s1, 3456, %s132, [#allocation6], 64, 64, 4
        $region16: #{tpu_custom_call.1} parent=11 // pred_fallthru
          _
        // Predicated region
        $region17: #{tpu_custom_call.1} parent=11 // pred_check
          %p138 = pneg %p84
        $region18: #{tpu_custom_call.1} parent=11 // pred_check_branch
          %140 = sbr.rel (%p138) target = $region20
        $region19: #{tpu_custom_call.1} parent=11 // pred_region
          _
        $region20: #{tpu_custom_call.1} parent=11 // pred_fallthru
          _
      $region12: #{tpu_custom_call.1} parent=5 // pred_fallthru
        _
      %p141 = scmp.lt.s32.totalorder %s16, 4
      // Predicated region
      $region21: #{tpu_custom_call.1} parent=5 // pred_check
        %p142 = pneg %p141
      $region22: #{tpu_custom_call.1} parent=5 // pred_check_branch
        %144 = sbr.rel (%p142) target = $region24
      $region23: #{tpu_custom_call.1} parent=5 // pred_region
        // Predicated region
        $region25: #{tpu_custom_call.1} parent=23 // pred_check
          %p145 = pneg %p36
        $region26: #{tpu_custom_call.1} parent=23 // pred_check_branch
          %147 = sbr.rel (%p145) target = $region28
        $region27: #{tpu_custom_call.1} parent=23 // pred_region
          %s148 = sand.u32 %s26, 1
          %s149 = scalar_lea.sflag [#allocation3], %s148
          %s150 = sand.u32 %s26, 1
          %s151 = smul.addr %s150, 32
          %s152 = scalar_lea.vmem [#allocation2], %s151
          %s153 = smul.u32 2, %s16
          %s155 = ssub.s32 512, 512
          %156 = vsyncadd %s149, %s155
          %s157 = smul.addr %s153, 4
          %s158 = smul.addr %s157, 64
          %s159 = scalar_lea.hbm %s0, %s158
          %s160 = sshll.u32 %s152, 4
          %s161 = int_to_ptr.vmem [resolvable:$true] %s160
          %166 = dma.hbm_to_vmem [thread:$0]  %s159, 512, %s161, %s149, 256, 256, 16
        $region28: #{tpu_custom_call.1} parent=23 // pred_fallthru
          _
      $region24: #{tpu_custom_call.1} parent=5 // pred_fallthru
        _
      %p167 = scmp.le.s32.totalorder 1, %s16
      %p168 = scmp.lt.s32.totalorder %s16, 5
      %p169 = pnand %p167, %p168
      %p170 = pneg %p169
      // Predicated region
      $region29: #{tpu_custom_call.1} parent=5 // pred_check
        _
      $region30: #{tpu_custom_call.1} parent=5 // pred_check_branch
        %172 = sbr.rel (%p169) target = $region32
      $region31: #{tpu_custom_call.1} parent=5 // pred_region
        %s173 = ssub.s32 %s16, 1
        %s174 = sand.u32 %s29, 1
        %s175 = scalar_lea.sflag [#allocation3], %s174
        %s176 = sand.u32 %s29, 1
        %s177 = smul.addr %s176, 32
        %s178 = scalar_lea.vmem [#allocation2], %s177
        // Predicated region
        $region33: #{tpu_custom_call.1} parent=31 // pred_check
          %p179 = pneg %p42
        $region34: #{tpu_custom_call.1} parent=31 // pred_check_branch
          %181 = sbr.rel (%p179) target = $region36
        $region35: #{tpu_custom_call.1} parent=31 // pred_region
          %182 = dma.done %s175, 512
        $region36: #{tpu_custom_call.1} parent=31 // pred_fallthru
          _
        // Predicated region
        $region37: #{tpu_custom_call.1} parent=31 // pred_check
          %p183 = pneg %p63
        $region38: #{tpu_custom_call.1} parent=31 // pred_check_branch
          %185 = sbr.rel (%p183) target = $region40
        $region39: #{tpu_custom_call.1} parent=31 // pred_region
          %186 = dma.done [#allocation6], 3456
        $region40: #{tpu_custom_call.1} parent=31 // pred_fallthru
          _
        %s187 = sand.u32 %s29, 1
        %s188 = scalar_lea.sflag [#allocation3], %s187
        %s189 = sand.u32 %s29, 1
        %s190 = smul.addr %s189, 32
        %s191 = scalar_lea.vmem [#allocation2], %s190
        %p192 = pneg %p42
        %p193 = pneg %p39
        %p194 = pneg %p63
        %p195 = pneg %p60
        %p196 = pneg %p84
        %p197 = pneg %p81
        %p198 = pneg %p110
        %p199 = pneg %p107
        %s200 = sand.u32 %s97, 1
        %s201 = scalar_lea.sflag [#allocation4], %s200
        %s202 = sand.u32 %s97, 1
        %s203 = smul.addr %s202, 8
        %s204 = scalar_lea.vmem [#allocation7], %s203
        %s205 = smul.u32 2, %s21
        %s206 = smul.u32 2, %s21
        %v208 = vld [vmem:[%s178] sm:$0xff]
        %v209 = vld [vmem:[%s178 + $0x8] sm:$0xff]
        %v210 = vld [vmem:[%s178 + $0x10] sm:$0xff]
        %v211 = vld [vmem:[%s178 + $0x18] sm:$0xff]
        %v212 = vld [vmem:[#allocation5] sm:$0xf]
        %v213 = vld [vmem:[#allocation5 + $0x4] sm:$0xf]
        %v214 = vld [vmem:[#allocation5 + $0x8] sm:$0xf]
        %v215 = vld [vmem:[#allocation5 + $0xc] sm:$0xf]
        %v216 = vld [vmem:[#allocation5 + $0x10] sm:$0xf]
        %v217 = vld [vmem:[#allocation5 + $0x14] sm:$0xf]
        %v218 = vld [vmem:[#allocation5 + $0x18] sm:$0xf]
        %v219 = vld [vmem:[#allocation5 + $0x1c] sm:$0xf]
        %v220 = vld [vmem:[#allocation5 + $0x20] sm:$0xf]
        %v221 = vld [vmem:[#allocation5 + $0x24] sm:$0xf]
        %v222 = vld [vmem:[#allocation5 + $0x28] sm:$0xf]
        %v223 = vld [vmem:[#allocation5 + $0x2c] sm:$0xf]
        %v224 = vld [vmem:[#allocation5 + $0x30] sm:$0xf]
        %v225 = vld [vmem:[#allocation5 + $0x34] sm:$0xf]
        %v226 = vld [vmem:[#allocation5 + $0x38] sm:$0xf]
        %v227 = vld [vmem:[#allocation5 + $0x3c] sm:$0xf]
        %v228 = vld [vmem:[#allocation5 + $0x40] sm:$0xf]
        %v229 = vld [vmem:[#allocation5 + $0x44] sm:$0xf]
        %v230 = vld [vmem:[#allocation5 + $0x48] sm:$0xf]
        %v231 = vld [vmem:[#allocation5 + $0x4c] sm:$0xf]
        %v232 = vld [vmem:[#allocation5 + $0x50] sm:$0xf]
        %v233 = vld [vmem:[#allocation5 + $0x54] sm:$0xf]
        %v234 = vld [vmem:[#allocation5 + $0x58] sm:$0xf]
        %v235 = vld [vmem:[#allocation5 + $0x5c] sm:$0xf]
        %v236 = vld [vmem:[#allocation5 + $0x60] sm:$0xf]
        %v237 = vld [vmem:[#allocation5 + $0x64] sm:$0xf]
        %v238 = vld [vmem:[#allocation5 + $0x68] sm:$0xf]
        %v239 = vld [vmem:[#allocation5 + $0x6c] sm:$0xf]
        %v240 = vld [vmem:[#allocation5 + $0x70] sm:$0xf]
        %v241 = vld [vmem:[#allocation5 + $0x74] sm:$0xf]
        %v242 = vld [vmem:[#allocation5 + $0x78] sm:$0xf]
        %v243 = vld [vmem:[#allocation5 + $0x7c] sm:$0xf]
        %v244 = vld [vmem:[#allocation5 + $0x80] sm:$0xf]
        %v245 = vld [vmem:[#allocation5 + $0x84] sm:$0xf]
        %v246 = vld [vmem:[#allocation5 + $0x88] sm:$0xf]
        %v247 = vld [vmem:[#allocation5 + $0x8c] sm:$0xf]
        %v248 = vld [vmem:[#allocation5 + $0x90] sm:$0xf]
        %v249 = vld [vmem:[#allocation5 + $0x94] sm:$0xf]
        %v250 = vld [vmem:[#allocation5 + $0x98] sm:$0xf]
        %v251 = vld [vmem:[#allocation5 + $0x9c] sm:$0xf]
        %v252 = vld [vmem:[#allocation5 + $0xa0] sm:$0xf]
        %v253 = vld [vmem:[#allocation5 + $0xa4] sm:$0xf]
        %v254 = vld [vmem:[#allocation5 + $0xa8] sm:$0xf]
        %v255 = vld [vmem:[#allocation5 + $0xac] sm:$0xf]
        %v256 = vld [vmem:[#allocation5 + $0xb0] sm:$0xf]
        %v257 = vld [vmem:[#allocation5 + $0xb4] sm:$0xf]
        %v258 = vld [vmem:[#allocation5 + $0xb8] sm:$0xf]
        %v259 = vld [vmem:[#allocation5 + $0xbc] sm:$0xf]
        %v260 = vld [vmem:[#allocation5 + $0xc0] sm:$0xf]
        %v261 = vld [vmem:[#allocation5 + $0xc4] sm:$0xf]
        %v262 = vld [vmem:[#allocation5 + $0xc8] sm:$0xf]
        %v263 = vld [vmem:[#allocation5 + $0xcc] sm:$0xf]
        %v264 = vld [vmem:[#allocation5 + $0xd0] sm:$0xf]
        %v265 = vld [vmem:[#allocation5 + $0xd4] sm:$0xf]
        %v266 = vld [vmem:[%s2] sm:$0x1]
        %v268 = vlaneseq
        %v269 = vshrl.u32 %v268, 7
        %v270 = vsub.s32 0, %v269
        %v271 = vrot.slane %v266, %v270
        %v277 = vunpack.c.l.b16 %v208
        %v278 = vunpack.c.h.b16 %v208
        %v279 = vunpack.c.l.b16 %v209
        %v280 = vunpack.c.h.b16 %v209
        %v281 = vunpack.c.l.b16 %v210
        %v282 = vunpack.c.h.b16 %v210
        %v283 = vunpack.c.l.b16 %v211
        %v284 = vunpack.c.h.b16 %v211
        %v285 = vpack.c.b16 %v281, %v277
        %v286 = vpack.c.b16 %v282, %v278
        %v287 = vpack.c.b16 %v283, %v279
        %v288 = vpack.c.b16 %v284, %v280
        %v346 = vunpack.c.l.b16 %v212
        %v347 = vunpack.c.l.b16 %v213
        %v348 = vunpack.c.l.b16 %v214
        %v349 = vunpack.c.l.b16 %v215
        %v350 = vunpack.c.l.b16 %v216
        %v351 = vunpack.c.l.b16 %v217
        %v352 = vunpack.c.l.b16 %v218
        %v353 = vunpack.c.l.b16 %v219
        %v354 = vunpack.c.l.b16 %v220
        %v355 = vunpack.c.l.b16 %v221
        %v356 = vunpack.c.l.b16 %v222
        %v357 = vunpack.c.l.b16 %v223
        %v358 = vunpack.c.l.b16 %v224
        %v359 = vunpack.c.l.b16 %v225
        %v360 = vunpack.c.l.b16 %v226
        %v361 = vunpack.c.l.b16 %v227
        %v362 = vunpack.c.l.b16 %v228
        %v363 = vunpack.c.l.b16 %v229
        %v364 = vunpack.c.l.b16 %v230
        %v365 = vunpack.c.l.b16 %v231
        %v366 = vunpack.c.l.b16 %v232
        %v367 = vunpack.c.l.b16 %v233
        %v368 = vunpack.c.l.b16 %v234
        %v369 = vunpack.c.l.b16 %v235
        %v370 = vunpack.c.l.b16 %v236
        %v371 = vunpack.c.l.b16 %v237
        %v372 = vunpack.c.l.b16 %v238
        %v373 = vunpack.c.l.b16 %v239
        %v374 = vunpack.c.l.b16 %v240
        %v375 = vunpack.c.l.b16 %v241
        %v376 = vunpack.c.l.b16 %v242
        %v377 = vunpack.c.l.b16 %v243
        %v378 = vunpack.c.l.b16 %v244
        %v379 = vunpack.c.l.b16 %v245
        %v380 = vunpack.c.l.b16 %v246
        %v381 = vunpack.c.l.b16 %v247
        %v382 = vunpack.c.l.b16 %v248
        %v383 = vunpack.c.l.b16 %v249
        %v384 = vunpack.c.l.b16 %v250
        %v385 = vunpack.c.l.b16 %v251
        %v386 = vunpack.c.l.b16 %v252
        %v387 = vunpack.c.l.b16 %v253
        %v388 = vunpack.c.l.b16 %v254
        %v389 = vunpack.c.l.b16 %v255
        %v390 = vunpack.c.l.b16 %v256
        %v391 = vunpack.c.l.b16 %v257
        %v392 = vunpack.c.l.b16 %v258
        %v393 = vunpack.c.l.b16 %v259
        %v394 = vunpack.c.l.b16 %v260
        %v395 = vunpack.c.l.b16 %v261
        %v396 = vunpack.c.l.b16 %v262
        %v397 = vunpack.c.l.b16 %v263
        %v398 = vunpack.c.l.b16 %v264
        %v399 = vunpack.c.l.b16 %v265
        %v400 = vpack.c.b16 %v347, %v346
        %v401 = vpack.c.b16 %v349, %v348
        %v402 = vpack.c.b16 %v351, %v350
        %v403 = vpack.c.b16 %v353, %v352
        %v404 = vpack.c.b16 %v355, %v354
        %v405 = vpack.c.b16 %v357, %v356
        %v406 = vpack.c.b16 %v359, %v358
        %v407 = vpack.c.b16 %v361, %v360
        %v408 = vpack.c.b16 %v363, %v362
        %v409 = vpack.c.b16 %v365, %v364
        %v410 = vpack.c.b16 %v367, %v366
        %v411 = vpack.c.b16 %v369, %v368
        %v412 = vpack.c.b16 %v371, %v370
        %v413 = vpack.c.b16 %v373, %v372
        %v414 = vpack.c.b16 %v375, %v374
        %v415 = vpack.c.b16 %v377, %v376
        %v416 = vpack.c.b16 %v379, %v378
        %v417 = vpack.c.b16 %v381, %v380
        %v418 = vpack.c.b16 %v383, %v382
        %v419 = vpack.c.b16 %v385, %v384
        %v420 = vpack.c.b16 %v387, %v386
        %v421 = vpack.c.b16 %v389, %v388
        %v422 = vpack.c.b16 %v391, %v390
        %v423 = vpack.c.b16 %v393, %v392
        %v424 = vpack.c.b16 %v395, %v394
        %v425 = vpack.c.b16 %v397, %v396
        %v426 = vpack.c.b16 %v399, %v398
        %vm454 = vcmask 392192
        %v456 = vsel %vm454, %v288, 0
        %458 = vmatprep.subr.bf16.mxu0 0
        %459 = vmatpush1.bf16.msra.mxu0 %v400
        %460 = vmatprep.subr.bf16.mxu0 0
        %461 = vmatpush1.bf16.msra.mxu0 %v401
        %462 = vmatprep.subr.bf16.mxu0 0
        %463 = vmatpush1.bf16.msra.mxu0 %v402
        %464 = vmatprep.subr.bf16.mxu0 0
        %465 = vmatpush1.bf16.msra.mxu0 %v403
        %466 = vmatprep.subr.bf16.mxu0 0
        %467 = vmatpush1.bf16.msra.mxu0 %v404
        %468 = vmatprep.subr.bf16.mxu0 0
        %469 = vmatpush1.bf16.msra.mxu0 %v405
        %470 = vmatprep.subr.bf16.mxu0 0
        %471 = vmatpush1.bf16.msra.mxu0 %v406
        %472 = vmatprep.subr.bf16.mxu0 0
        %473 = vmatpush1.bf16.msra.mxu0 %v407
        %474 = vmatprep.subr.bf16.mxu0 0
        %475 = vmatpush1.bf16.msra.mxu0 %v408
        %476 = vmatprep.subr.bf16.mxu0 0
        %477 = vmatpush1.bf16.msra.mxu0 %v409
        %478 = vmatprep.subr.bf16.mxu0 0
        %479 = vmatpush1.bf16.msra.mxu0 %v410
        %480 = vmatprep.subr.bf16.mxu0 0
        %481 = vmatpush1.bf16.msra.mxu0 %v411
        %482 = vmatprep.subr.bf16.mxu0 0
        %483 = vmatpush1.bf16.msra.mxu0 %v412
        %484 = vmatprep.subr.bf16.mxu0 0
        %485 = vmatpush1.bf16.msra.mxu0 %v413
        %486 = vmatprep.subr.bf16.mxu0 0
        %487 = vmatpush1.bf16.msra.mxu0 %v414
        %488 = vmatprep.subr.bf16.mxu0 0
        %489 = vmatpush1.bf16.msra.mxu0 %v415
        %490 = vmatprep.mubr.bf16.mxu0 %v286
        %491 = vmatmul.mubr.bf16.gmra.mrb[0].mxu0 %v285
        %v492 = vpop.f32.mrb[0].mxu0
        %v493 = vadd.f32 %v271, %v492
        %v494 = vpop.f32.mrb[0].mxu0
        %v495 = vpop.f32.mrb[0].mxu0
        %v496 = vadd.f32 %v271, %v495
        %v497 = vpop.f32.mrb[0].mxu0
        %498 = vdwg.mxu0
        %499 = vmatprep.subr.bf16.mxu0 0
        %500 = vmatpush1.bf16.msra.mxu0 %v416
        %501 = vmatprep.subr.bf16.mxu0 0
        %502 = vmatpush1.bf16.msra.mxu0 %v417
        %503 = vmatprep.subr.bf16.mxu0 0
        %504 = vmatpush1.bf16.msra.mxu0 %v418
        %505 = vmatprep.subr.bf16.mxu0 0
        %506 = vmatpush1.bf16.msra.mxu0 %v419
        %507 = vmatprep.subr.bf16.mxu0 0
        %508 = vmatpush1.bf16.msra.mxu0 %v420
        %509 = vmatprep.subr.bf16.mxu0 0
        %510 = vmatpush1.bf16.msra.mxu0 %v421
        %511 = vmatprep.subr.bf16.mxu0 0
        %512 = vmatpush1.bf16.msra.mxu0 %v422
        %513 = vmatprep.subr.bf16.mxu0 0
        %514 = vmatpush1.bf16.msra.mxu0 %v423
        %515 = vmatprep.subr.bf16.mxu0 0
        %516 = vmatpush1.bf16.msra.mxu0 %v424
        %517 = vmatprep.subr.bf16.mxu0 0
        %518 = vmatpush1.bf16.msra.mxu0 %v425
        %519 = vmatprep.subr.bf16.mxu0 0
        %520 = vmatpush1.bf16.msra.mxu0 %v426
        %521 = vmatprep.subr.bf16.mxu0 0
        %522 = vmatpush1.bf16.msra.mxu0 0
        %523 = vmatprep.subr.bf16.mxu0 0
        %524 = vmatpush1.bf16.msra.mxu0 0
        %525 = vmatprep.subr.bf16.mxu0 0
        %526 = vmatpush1.bf16.msra.mxu0 0
        %527 = vmatprep.subr.bf16.mxu0 0
        %528 = vmatpush1.bf16.msra.mxu0 0
        %529 = vmatprep.subr.bf16.mxu0 0
        %530 = vmatpush1.bf16.msra.mxu0 0
        %531 = vmatprep.mubr.bf16.mxu0 %v456
        %532 = vmatmul.mubr.bf16.gmra.mrb[0].mxu0 %v287
        %v533 = vpop.f32.mrb[0].mxu0
        %v534 = vadd.f32 %v493, %v533
        %v535 = vpop.f32.mrb[0].mxu0
        %v536 = vpop.f32.mrb[0].mxu0
        %v537 = vadd.f32 %v496, %v536
        %v538 = vpop.f32.mrb[0].mxu0
        %539 = vdwg.mxu0
        %v540 = vpack.c.bf16 %v537, %v534
        %v542 = vunpack.c.l.b16 %v540
        %v543 = vunpack.c.h.b16 %v540
        %v544 = vpack.c.b16 %v542, %v542
        %v545 = vpack.c.b16 %v543, %v543
        %548 = vst [vmem:[%s204] sm:$0xf] %v544
        %549 = vst [vmem:[%s204 + $0x4] sm:$0xf] %v545
        %s550 = sand.u32 %s97, 1
        %s551 = scalar_lea.sflag [#allocation4], %s550
        %s552 = sand.u32 %s97, 1
        %s553 = smul.addr %s552, 8
        %s554 = scalar_lea.vmem [#allocation7], %s553
        // Predicated region
        $region41: #{tpu_custom_call.1} parent=31 // pred_check
          %p555 = pneg %p107
        $region42: #{tpu_custom_call.1} parent=31 // pred_check_branch
          %557 = sbr.rel (%p555) target = $region44
        $region43: #{tpu_custom_call.1} parent=31 // pred_region
          %s558 = smul.u32 2, %s21
          %s560 = ssub.s32 128, 128
          %561 = vsyncadd %s551, %s560
          %s562 = smul.addr %s558, 64
          %s563 = scalar_lea.hbm %s3, %s562
          %s564 = sshll.u32 %s554, 4
          %s565 = int_to_ptr.vmem [resolvable:$true] %s564
          %570 = dma.vmem_to_hbm [thread:$0]  %s565, 128, %s563, %s551, 64, 64, 4
        $region44: #{tpu_custom_call.1} parent=31 // pred_fallthru
          _
      $region32: #{tpu_custom_call.1} parent=5 // pred_fallthru
        _
      %p571 = scmp.le.s32.totalorder 2, %s16
      // Predicated region
      $region45: #{tpu_custom_call.1} parent=5 // pred_check
        %p572 = pneg %p571
      $region46: #{tpu_custom_call.1} parent=5 // pred_check_branch
        %574 = sbr.rel (%p572) target = $region48
      $region47: #{tpu_custom_call.1} parent=5 // pred_region
        %s575 = ssub.s32 %s16, 2
        // Predicated region
        $region49: #{tpu_custom_call.1} parent=47 // pred_check
          %p576 = pneg %p113
        $region50: #{tpu_custom_call.1} parent=47 // pred_check_branch
          %578 = sbr.rel (%p576) target = $region52
        $region51: #{tpu_custom_call.1} parent=47 // pred_region
          %s579 = sand.u32 %s98, 1
          %s580 = scalar_lea.sflag [#allocation4], %s579
          %s581 = sand.u32 %s98, 1
          %s582 = smul.addr %s581, 8
          %s583 = scalar_lea.vmem [#allocation7], %s582
          %584 = dma.done %s580, 128
        $region52: #{tpu_custom_call.1} parent=47 // pred_fallthru
          _
      $region48: #{tpu_custom_call.1} parent=5 // pred_fallthru
        _
    $region6: #{tpu_custom_call.1} parent=1 // loop_footer
      %s20 = sadd.s32 1, %s16
    $region7: #{tpu_custom_call.1} parent=1 // loop_footer_branch
      %15 = sbr.rel target = $region3
    $region8: #{tpu_custom_call.1} parent=1 // loop_exit
      _
    %585 = vsyncpa [#allocation3], 1
    %s586 = scalar_lea.sflag [#allocation3], 1
    %587 = vsyncpa %s586, 1
    %588 = vsyncpa [#allocation6], 1
    %589 = vsyncpa [#allocation4], 1
    %s590 = scalar_lea.sflag [#allocation4], 1
    %591 = vsyncpa %s590, 1

</llo_original>
